<compile_context>
chip_gen: v7x
topology: tpu7x:2x2x1
jax: 0.10.0
libtpu: 0.0.40
codegen_flags: <defaults>
</compile_context>

<pallas_src>
import functools

import jax
import jax.numpy as jnp
from jax.experimental import pallas as pl
from jax.experimental.pallas import tpu as pltpu


def periodic_conv_transpose_2d(x, weight, bias, *, stride, pad_width):
    """Forward of PeriodicConvTranspose2D.

    x:      (N, C_in, H, W)
    weight: (C_in, C_out, K, K)   (PyTorch ConvTranspose2d layout)
    bias:   (C_out,)
    returns (N, C_out, (H+2p-1)*stride + K, (W+2p-1)*stride + K)
    """
    n, cin, h, w = x.shape
    cin_w, cout, k, k2 = weight.shape
    assert cin_w == cin and k == k2
    s = stride
    p = pad_width
    ring = (k - 1) // s                       # zero ring for phase border handling

    x = x.astype(jnp.float32)
    # --- PeriodicPadding2D: circular along W, zeros along H (fused with ring pad) ---
    if p > 0:
        x = jnp.concatenate([x[:, :, :, -p:], x, x[:, :, :, :p]], axis=-1)
    x = jnp.pad(x, ((0, 0), (0, 0), (p + ring, p + ring), (ring, ring)))

    hp, wp = h + 2 * p, w + 2 * p             # extent the transposed conv sees
    hz, wz = hp + 2 * ring, wp + 2 * ring     # zero-ringed extent held in VMEM
    hout, wout = (hp - 1) * s + k, (wp - 1) * s + k

    nhw = n * hz * wz                         # lane-dense flattened spatial dim
    off_max = ring * wz + ring                # largest flat shift used by any tap
    lx = nhw + off_max                        # padded lane width so slices stay in-bounds
    kkc = k * k * cout

    # --- lane-dense operands ---
    x2 = jnp.transpose(x, (1, 0, 2, 3)).reshape(cin, nhw)          # (cin, n*hz*wz)
    x2 = jnp.pad(x2, ((0, 0), (0, lx - nhw)))                      # (cin, lx)
    wmat = jnp.transpose(weight.astype(jnp.float32), (2, 3, 1, 0)).reshape(kkc, cin)
    b2 = bias.astype(jnp.float32).reshape(cout, 1)

    def kernel(x_ref, w_ref, b_ref, o_ref, c_ref):
        # x_ref: (cin, lx)      flattened zero-ringed input, lane-dense
        # w_ref: (kkc, cin)     weights, rows = (kh, kw, co)
        # b_ref: (cout, 1)
        # o_ref: (s*s, cout, nhw)  per-phase outputs, lane-dense last dim
        # c_ref: (kkc, lx)      scratch: per-tap channel contractions
        # ---- channel contraction, vectorised over all (kh,kw,co) rows at once ----
        c = w_ref[:, 0:1] * x_ref[0:1, :]
        for ci in range(1, cin):
            c = c + w_ref[:, ci:ci + 1] * x_ref[ci:ci + 1, :]
        c_ref[...] = c                                  # (kkc, lx)
        b = b_ref[...]                                  # (cout, 1) -> lane broadcast
        # ---- phase accumulation: out[.., ih*s+kh, iw*s+kw] += c_tap[.., ih, iw] ----
        # On the zero-ringed flat layout this is a plain lane offset per tap.
        for rh in range(s):
            for rw in range(s):
                acc = jnp.zeros((cout, nhw), jnp.float32)
                ndh = (k - rh + s - 1) // s
                ndw = (k - rw + s - 1) // s
                for dh in range(ndh):
                    kh = rh + s * dh
                    for dw in range(ndw):
                        kw = rw + s * dw
                        row = (kh * k + kw) * cout
                        off = (ring - dh) * wz + (ring - dw)
                        acc = acc + c_ref[row:row + cout, off:off + nhw]
                o_ref[rh * s + rw] = acc + b

    phases = pl.pallas_call(
        kernel,
        out_shape=jax.ShapeDtypeStruct((s * s, cout, nhw), jnp.float32),
        grid=(1,),
        in_specs=[
            pl.BlockSpec((cin, lx), lambda i: (0, 0)),
            pl.BlockSpec((kkc, cin), lambda i: (0, 0)),
            pl.BlockSpec((cout, 1), lambda i: (0, 0)),
        ],
        out_specs=pl.BlockSpec((s * s, cout, nhw), lambda i: (0, 0, 0)),
        scratch_shapes=[pltpu.VMEM((kkc, lx), jnp.float32)],
        compiler_params=pltpu.CompilerParams(
            dimension_semantics=("arbitrary",)),
    )(x2, wmat, b2)

    # --- interleave the stride**2 phases into the final output (tiny XLA glue) ---
    phases = phases.reshape(s, s, cout, n, hz, wz)
    out = jnp.zeros((n, cout, hout, wout), jnp.float32)
    for rh in range(s):
        for rw in range(s):
            qh = (hout - rh + s - 1) // s
            qw = (wout - rw + s - 1) // s
            blk = phases[rh, rw, :, :, :qh, :qw]          # (cout, n, qh, qw)
            out = out.at[:, :, rh::s, rw::s].set(jnp.transpose(blk, (1, 0, 2, 3)))
    return out


def _reference(x, weight, bias, *, stride, pad_width):
    """Pure-JAX reference matching PyTorch semantics (scatter-add form)."""
    p = pad_width
    if p > 0:
        x = jnp.concatenate([x[:, :, :, -p:], x, x[:, :, :, :p]], axis=-1)
        x = jnp.pad(x, ((0, 0), (0, 0), (p, p), (0, 0)))
    n, cin, hi, wi = x.shape
    cout, k = weight.shape[1], weight.shape[2]
    hout, wout = (hi - 1) * stride + k, (wi - 1) * stride + k
    out = jnp.zeros((n, cout, hout, wout), jnp.float32)
    for kh in range(k):
        for kw in range(k):
            contrib = jnp.einsum("nchw,cd->ndhw", x, weight[:, :, kh, kw])
            out = out.at[:, :,
                         kh:kh + (hi - 1) * stride + 1:stride,
                         kw:kw + (wi - 1) * stride + 1:stride].add(contrib)
    return out + bias[None, :, None, None]


if __name__ == "__main__":
    key = jax.random.PRNGKey(0)
    kx, kw_, kb = jax.random.split(key, 3)

    # PeriodicConvTranspose2D(in_channels=4, out_channels=3, kernel_size=3,
    #                         stride=2, padding=1)
    N, C_IN, H, W = 2, 4, 8, 8
    C_OUT, K, STRIDE, PAD = 3, 3, 2, 1

    x = jax.random.normal(kx, (N, C_IN, H, W), jnp.float32)
    bound = 1.0 / (C_IN * K * K) ** 0.5
    weight = jax.random.uniform(kw_, (C_IN, C_OUT, K, K), jnp.float32, -bound, bound)
    bias = jax.random.uniform(kb, (C_OUT,), jnp.float32, -bound, bound)

    fwd = jax.jit(functools.partial(periodic_conv_transpose_2d,
                                    stride=STRIDE, pad_width=PAD))
    out = jax.block_until_ready(fwd(x, weight, bias))

    ref = _reference(x, weight, bias, stride=STRIDE, pad_width=PAD)
    assert out.shape == ref.shape, (out.shape, ref.shape)
    max_err = float(jnp.max(jnp.abs(out - ref)))
    if not jnp.allclose(out, ref, atol=1e-4, rtol=1e-4):
        raise SystemExit(f"mismatch: max abs err {max_err:e}")
    print("KERNEL_OK")
</pallas_src>

<mosaic_0001>
module attributes {stable_mosaic.version = 11 : i64} {
  func.func @kernel(%arg0: i32, %arg1: memref<4x301xf32, #tpu.memory_space<vmem>>, %arg2: memref<27x4xf32, #tpu.memory_space<vmem>>, %arg3: memref<3x1xf32, #tpu.memory_space<vmem>>, %arg4: memref<4x3x288xf32, #tpu.memory_space<vmem>>, %arg5: memref<27x301xf32, #tpu.memory_space<vmem>>) attributes {dimension_semantics = [#tpu.dimension_semantics<arbitrary>], iteration_bounds = array<i64: 1>, scalar_prefetch = 0 : i64, scratch_operands = 1 : i64, tpu.core_type = #tpu.core_type<tc>, window_params = [{pipeline_mode = #tpu.pipeline_mode<synchronous>, transform_indices = @transform_0, window_bounds = array<i64: 4, 301>}, {pipeline_mode = #tpu.pipeline_mode<synchronous>, transform_indices = @transform_1, window_bounds = array<i64: 27, 4>}, {pipeline_mode = #tpu.pipeline_mode<synchronous>, transform_indices = @transform_2, window_bounds = array<i64: 3, 1>}, {pipeline_mode = #tpu.pipeline_mode<synchronous>, transform_indices = @transform_3, window_bounds = array<i64: 4, 3, 288>}]} {
    %c0 = arith.constant 0 : index
    %c0_0 = arith.constant 0 : index
    %0 = vector.load %arg2[%c0, %c0_0] : memref<27x4xf32, #tpu.memory_space<vmem>>, vector<27x1xf32>
    %c0_1 = arith.constant 0 : index
    %c0_2 = arith.constant 0 : index
    %1 = vector.load %arg1[%c0_1, %c0_2] : memref<4x301xf32, #tpu.memory_space<vmem>>, vector<1x301xf32>
    %2 = vector.broadcast %0 : vector<27x1xf32> to vector<27x301xf32>
    %3 = vector.broadcast %1 : vector<1x301xf32> to vector<27x301xf32>
    %4 = arith.mulf %2, %3 : vector<27x301xf32>
    %c0_3 = arith.constant 0 : index
    %c1 = arith.constant 1 : index
    %5 = vector.load %arg2[%c0_3, %c1] : memref<27x4xf32, #tpu.memory_space<vmem>>, vector<27x1xf32>
    %c1_4 = arith.constant 1 : index
    %c0_5 = arith.constant 0 : index
    %6 = vector.load %arg1[%c1_4, %c0_5] : memref<4x301xf32, #tpu.memory_space<vmem>>, vector<1x301xf32>
    %7 = vector.broadcast %5 : vector<27x1xf32> to vector<27x301xf32>
    %8 = vector.broadcast %6 : vector<1x301xf32> to vector<27x301xf32>
    %9 = arith.mulf %7, %8 : vector<27x301xf32>
    %10 = arith.addf %4, %9 : vector<27x301xf32>
    %c0_6 = arith.constant 0 : index
    %c2 = arith.constant 2 : index
    %11 = vector.load %arg2[%c0_6, %c2] : memref<27x4xf32, #tpu.memory_space<vmem>>, vector<27x1xf32>
    %c2_7 = arith.constant 2 : index
    %c0_8 = arith.constant 0 : index
    %12 = vector.load %arg1[%c2_7, %c0_8] : memref<4x301xf32, #tpu.memory_space<vmem>>, vector<1x301xf32>
    %13 = vector.broadcast %11 : vector<27x1xf32> to vector<27x301xf32>
    %14 = vector.broadcast %12 : vector<1x301xf32> to vector<27x301xf32>
    %15 = arith.mulf %13, %14 : vector<27x301xf32>
    %16 = arith.addf %10, %15 : vector<27x301xf32>
    %c0_9 = arith.constant 0 : index
    %c3 = arith.constant 3 : index
    %17 = vector.load %arg2[%c0_9, %c3] : memref<27x4xf32, #tpu.memory_space<vmem>>, vector<27x1xf32>
    %c3_10 = arith.constant 3 : index
    %c0_11 = arith.constant 0 : index
    %18 = vector.load %arg1[%c3_10, %c0_11] : memref<4x301xf32, #tpu.memory_space<vmem>>, vector<1x301xf32>
    %19 = vector.broadcast %17 : vector<27x1xf32> to vector<27x301xf32>
    %20 = vector.broadcast %18 : vector<1x301xf32> to vector<27x301xf32>
    %21 = arith.mulf %19, %20 : vector<27x301xf32>
    %22 = arith.addf %16, %21 : vector<27x301xf32>
    %c0_12 = arith.constant 0 : index
    %c0_13 = arith.constant 0 : index
    %23 = vector.load %arg5[%c0_12, %c0_13] : memref<27x301xf32, #tpu.memory_space<vmem>>, vector<27x301xf32>
    tpu.vector_store %arg5[%c0_12, %c0_13], %22 {strides = array<i32>} : memref<27x301xf32, #tpu.memory_space<vmem>>, vector<27x301xf32>,
    %c0_14 = arith.constant 0 : index
    %c0_15 = arith.constant 0 : index
    %24 = vector.load %arg3[%c0_14, %c0_15] : memref<3x1xf32, #tpu.memory_space<vmem>>, vector<3x1xf32>
    %cst = arith.constant 0.000000e+00 : f32
    %25 = vector.broadcast %cst : f32 to vector<3x288xf32>
    %c0_16 = arith.constant 0 : index
    %c13 = arith.constant 13 : index
    %26 = vector.load %arg5[%c0_16, %c13] : memref<27x301xf32, #tpu.memory_space<vmem>>, vector<3x288xf32>
    %27 = arith.addf %25, %26 : vector<3x288xf32>
    %c6 = arith.constant 6 : index
    %c12 = arith.constant 12 : index
    %28 = vector.load %arg5[%c6, %c12] : memref<27x301xf32, #tpu.memory_space<vmem>>, vector<3x288xf32>
    %29 = arith.addf %27, %28 : vector<3x288xf32>
    %c18 = arith.constant 18 : index
    %c1_17 = arith.constant 1 : index
    %30 = vector.load %arg5[%c18, %c1_17] : memref<27x301xf32, #tpu.memory_space<vmem>>, vector<3x288xf32>
    %31 = arith.addf %29, %30 : vector<3x288xf32>
    %c24 = arith.constant 24 : index
    %c0_18 = arith.constant 0 : index
    %32 = vector.load %arg5[%c24, %c0_18] : memref<27x301xf32, #tpu.memory_space<vmem>>, vector<3x288xf32>
    %33 = arith.addf %31, %32 : vector<3x288xf32>
    %34 = vector.broadcast %24 : vector<3x1xf32> to vector<3x288xf32>
    %35 = arith.addf %33, %34 : vector<3x288xf32>
    %c0_19 = arith.constant 0 : index
    %c0_20 = arith.constant 0 : index
    %c0_21 = arith.constant 0 : index
    %36 = vector.load %arg4[%c0_19, %c0_20, %c0_21] : memref<4x3x288xf32, #tpu.memory_space<vmem>>, vector<1x3x288xf32>
    %37 = vector.shape_cast %36 : vector<1x3x288xf32> to vector<3x288xf32>
    %38 = vector.shape_cast %35 : vector<3x288xf32> to vector<1x3x288xf32>
    tpu.vector_store %arg4[%c0_19, %c0_20, %c0_21], %38 {strides = array<i32>} : memref<4x3x288xf32, #tpu.memory_space<vmem>>, vector<1x3x288xf32>,
    %cst_22 = arith.constant 0.000000e+00 : f32
    %39 = vector.broadcast %cst_22 : f32 to vector<3x288xf32>
    %c3_23 = arith.constant 3 : index
    %c13_24 = arith.constant 13 : index
    %40 = vector.load %arg5[%c3_23, %c13_24] : memref<27x301xf32, #tpu.memory_space<vmem>>, vector<3x288xf32>
    %41 = arith.addf %39, %40 : vector<3x288xf32>
    %c21 = arith.constant 21 : index
    %c1_25 = arith.constant 1 : index
    %42 = vector.load %arg5[%c21, %c1_25] : memref<27x301xf32, #tpu.memory_space<vmem>>, vector<3x288xf32>
    %43 = arith.addf %41, %42 : vector<3x288xf32>
    %44 = vector.broadcast %24 : vector<3x1xf32> to vector<3x288xf32>
    %45 = arith.addf %43, %44 : vector<3x288xf32>
    %c1_26 = arith.constant 1 : index
    %c0_27 = arith.constant 0 : index
    %c0_28 = arith.constant 0 : index
    %46 = vector.load %arg4[%c1_26, %c0_27, %c0_28] : memref<4x3x288xf32, #tpu.memory_space<vmem>>, vector<1x3x288xf32>
    %47 = vector.shape_cast %46 : vector<1x3x288xf32> to vector<3x288xf32>
    %48 = vector.shape_cast %45 : vector<3x288xf32> to vector<1x3x288xf32>
    tpu.vector_store %arg4[%c1_26, %c0_27, %c0_28], %48 {strides = array<i32>} : memref<4x3x288xf32, #tpu.memory_space<vmem>>, vector<1x3x288xf32>,
    %cst_29 = arith.constant 0.000000e+00 : f32
    %49 = vector.broadcast %cst_29 : f32 to vector<3x288xf32>
    %c9 = arith.constant 9 : index
    %c13_30 = arith.constant 13 : index
    %50 = vector.load %arg5[%c9, %c13_30] : memref<27x301xf32, #tpu.memory_space<vmem>>, vector<3x288xf32>
    %51 = arith.addf %49, %50 : vector<3x288xf32>
    %c15 = arith.constant 15 : index
    %c12_31 = arith.constant 12 : index
    %52 = vector.load %arg5[%c15, %c12_31] : memref<27x301xf32, #tpu.memory_space<vmem>>, vector<3x288xf32>
    %53 = arith.addf %51, %52 : vector<3x288xf32>
    %54 = vector.broadcast %24 : vector<3x1xf32> to vector<3x288xf32>
    %55 = arith.addf %53, %54 : vector<3x288xf32>
    %c2_32 = arith.constant 2 : index
    %c0_33 = arith.constant 0 : index
    %c0_34 = arith.constant 0 : index
    %56 = vector.load %arg4[%c2_32, %c0_33, %c0_34] : memref<4x3x288xf32, #tpu.memory_space<vmem>>, vector<1x3x288xf32>
    %57 = vector.shape_cast %56 : vector<1x3x288xf32> to vector<3x288xf32>
    %58 = vector.shape_cast %55 : vector<3x288xf32> to vector<1x3x288xf32>
    tpu.vector_store %arg4[%c2_32, %c0_33, %c0_34], %58 {strides = array<i32>} : memref<4x3x288xf32, #tpu.memory_space<vmem>>, vector<1x3x288xf32>,
    %cst_35 = arith.constant 0.000000e+00 : f32
    %59 = vector.broadcast %cst_35 : f32 to vector<3x288xf32>
    %c12_36 = arith.constant 12 : index
    %c13_37 = arith.constant 13 : index
    %60 = vector.load %arg5[%c12_36, %c13_37] : memref<27x301xf32, #tpu.memory_space<vmem>>, vector<3x288xf32>
    %61 = arith.addf %59, %60 : vector<3x288xf32>
    %62 = vector.broadcast %24 : vector<3x1xf32> to vector<3x288xf32>
    %63 = arith.addf %61, %62 : vector<3x288xf32>
    %c3_38 = arith.constant 3 : index
    %c0_39 = arith.constant 0 : index
    %c0_40 = arith.constant 0 : index
    %64 = vector.load %arg4[%c3_38, %c0_39, %c0_40] : memref<4x3x288xf32, #tpu.memory_space<vmem>>, vector<1x3x288xf32>
    %65 = vector.shape_cast %64 : vector<1x3x288xf32> to vector<3x288xf32>
    %66 = vector.shape_cast %63 : vector<3x288xf32> to vector<1x3x288xf32>
    tpu.vector_store %arg4[%c3_38, %c0_39, %c0_40], %66 {strides = array<i32>} : memref<4x3x288xf32, #tpu.memory_space<vmem>>, vector<1x3x288xf32>,
    return
  }
  func.func @transform_0(%arg0: i32) -> (i32, i32) {
    %c0_i32 = arith.constant 0 : i32
    %c0_i32_0 = arith.constant 0 : i32
    %c0_i32_1 = arith.constant 0 : i32
    return %c0_i32, %c0_i32_0 : i32, i32
  }
  func.func @transform_1(%arg0: i32) -> (i32, i32) {
    %c0_i32 = arith.constant 0 : i32
    %c0_i32_0 = arith.constant 0 : i32
    %c0_i32_1 = arith.constant 0 : i32
    return %c0_i32, %c0_i32_0 : i32, i32
  }
  func.func @transform_2(%arg0: i32) -> (i32, i32) {
    %c0_i32 = arith.constant 0 : i32
    %c0_i32_0 = arith.constant 0 : i32
    %c0_i32_1 = arith.constant 0 : i32
    return %c0_i32, %c0_i32_0 : i32, i32
  }
  func.func @transform_3(%arg0: i32) -> (i32, i32, i32) {
    %c0_i32 = arith.constant 0 : i32
    %c0_i32_0 = arith.constant 0 : i32
    %c0_i32_1 = arith.constant 0 : i32
    %c0_i32_2 = arith.constant 0 : i32
    return %c0_i32, %c0_i32_0, %c0_i32_1 : i32, i32, i32
  }
}

</mosaic_0001>

<llo_original>
// kernel: periodic_conv_transpose_2d.1
$region0: #{periodic_conv_transpose_2d.1}
  #allocation0 [shape = 'u32[]', space=smem, size = 0x4, offset = 0x4, fixed_abs, tag = 'smem constant byte address 0x4 - core index']
  #allocation1 [shape = 'u32[144,128]{1,0:T(1,128)}', space=vmem, size = 0x12000, scoped, tag = 'internal scratch']
  #allocation2 [shape = 'f32[27,301]{1,0:T(8,128)}', space=vmem, size = 0xc000, scoped, tag = 'scratch operand']
  %s0 = inlined_call_operand.vmem [shape: f32[4,301], index: 0, kind: input, shape index: {}]
  %s1 = inlined_call_operand.vmem [shape: f32[27,4], index: 1, kind: input, shape index: {}]
  %s2 = inlined_call_operand.vmem [shape: f32[3,1], index: 2, kind: input, shape index: {}]
  %s3 = inlined_call_operand.vmem [shape: f32[4,3,288], index: 3, kind: output, shape index: {}]
  %s4 = sld [smem:[#allocation0]]
  $region22: #{periodic_conv_transpose_2d.1} parent=0
    _
  %s6 = ssub.s32 1, %s4
  %s7 = scalar_select 0, %s6, %s4
  // Predicated region
  $region2: #{periodic_conv_transpose_2d.1} parent=0 // pred_check
    _
  $region3: #{periodic_conv_transpose_2d.1} parent=0 // pred_check_branch
    %9 = sbr.rel (0) target = $region5
  $region4: #{periodic_conv_transpose_2d.1} parent=0 // pred_region
    _
  $region5: #{periodic_conv_transpose_2d.1} parent=0 // pred_fallthru
    _
  // Predicated region
  $region6: #{periodic_conv_transpose_2d.1} parent=0 // pred_check
    _
  $region7: #{periodic_conv_transpose_2d.1} parent=0 // pred_check_branch
    %11 = sbr.rel (0) target = $region9
  $region8: #{periodic_conv_transpose_2d.1} parent=0 // pred_region
    _
  $region9: #{periodic_conv_transpose_2d.1} parent=0 // pred_fallthru
    _
  // Predicated region
  $region10: #{periodic_conv_transpose_2d.1} parent=0 // pred_check
    _
  $region11: #{periodic_conv_transpose_2d.1} parent=0 // pred_check_branch
    %13 = sbr.rel (0) target = $region13
  $region12: #{periodic_conv_transpose_2d.1} parent=0 // pred_region
    _
  $region13: #{periodic_conv_transpose_2d.1} parent=0 // pred_fallthru
    _
  %v14 = vld [vmem:[%s1] sm:$0xff]
  %v15 = vld [vmem:[%s1 + $0x8] sm:$0xff]
  %v16 = vld [vmem:[%s1 + $0x10] sm:$0xff]
  %v17 = vld [vmem:[%s1 + $0x18] sm:$0x7]
  %v18 = vld [vmem:[%s0] ss:$4 sm:$0x7]
  %20 = vset.pattern.permute.xlu0 0
  %21 = vperm.xlu0 %20, %v14
  %v22 = vpop.permute.xlu0 %21
  %25 = vset.pattern.permute.xlu0 0
  %26 = vperm.xlu0 %25, %v15
  %v27 = vpop.permute.xlu0 %26
  %30 = vset.pattern.permute.xlu0 0
  %31 = vperm.xlu0 %30, %v16
  %v32 = vpop.permute.xlu0 %31
  %35 = vset.pattern.permute.xlu0 0
  %36 = vperm.xlu0 %35, %v17
  %v37 = vpop.permute.xlu0 %36
  %v40 = vlaneseq
  %v41 = vshrl.u32 %v40, 7
  %v42 = vsub.s32 0, %v41
  %v43 = vrot.slane %v18, %v42
  %v44 = vlaneseq
  %v45 = vshrl.u32 %v44, 7
  %v46 = vsub.s32 1, %v45
  %v47 = vrot.slane %v18, %v46
  %v48 = vlaneseq
  %v49 = vshrl.u32 %v48, 7
  %v50 = vsub.s32 2, %v49
  %v51 = vrot.slane %v18, %v50
  %v55 = vmul.f32 %v22, %v43
  %v56 = vmul.f32 %v22, %v47
  %v57 = vmul.f32 %v22, %v51
  %v58 = vmul.f32 %v27, %v43
  %v59 = vmul.f32 %v27, %v47
  %v60 = vmul.f32 %v27, %v51
  %v61 = vmul.f32 %v32, %v43
  %v62 = vmul.f32 %v32, %v47
  %v63 = vmul.f32 %v32, %v51
  %v64 = vmul.f32 %v37, %v43
  %v65 = vmul.f32 %v37, %v47
  %v66 = vmul.f32 %v37, %v51
  %s67 = scalar_lea.vmem %s0, 1
  %v68 = vld [vmem:[%s67] ss:$4 sm:$0x7]
  %69 = vset.pattern.permute.xlu0 1
  %70 = vperm.xlu0 %69, %v14
  %v71 = vpop.permute.xlu0 %70
  %73 = vset.pattern.permute.xlu0 1
  %74 = vperm.xlu0 %73, %v15
  %v75 = vpop.permute.xlu0 %74
  %77 = vset.pattern.permute.xlu0 1
  %78 = vperm.xlu0 %77, %v16
  %v79 = vpop.permute.xlu0 %78
  %81 = vset.pattern.permute.xlu0 1
  %82 = vperm.xlu0 %81, %v17
  %v83 = vpop.permute.xlu0 %82
  %v86 = vlaneseq
  %v87 = vshrl.u32 %v86, 7
  %v88 = vsub.s32 0, %v87
  %v89 = vrot.slane %v68, %v88
  %v90 = vlaneseq
  %v91 = vshrl.u32 %v90, 7
  %v92 = vsub.s32 1, %v91
  %v93 = vrot.slane %v68, %v92
  %v94 = vlaneseq
  %v95 = vshrl.u32 %v94, 7
  %v96 = vsub.s32 2, %v95
  %v97 = vrot.slane %v68, %v96
  %v101 = vmul.f32 %v71, %v89
  %v102 = vmul.f32 %v71, %v93
  %v103 = vmul.f32 %v71, %v97
  %v104 = vmul.f32 %v75, %v89
  %v105 = vmul.f32 %v75, %v93
  %v106 = vmul.f32 %v75, %v97
  %v107 = vmul.f32 %v79, %v89
  %v108 = vmul.f32 %v79, %v93
  %v109 = vmul.f32 %v79, %v97
  %v110 = vmul.f32 %v83, %v89
  %v111 = vmul.f32 %v83, %v93
  %v112 = vmul.f32 %v83, %v97
  %v113 = vadd.f32 %v55, %v101
  %v114 = vadd.f32 %v56, %v102
  %v115 = vadd.f32 %v57, %v103
  %v116 = vadd.f32 %v58, %v104
  %v117 = vadd.f32 %v59, %v105
  %v118 = vadd.f32 %v60, %v106
  %v119 = vadd.f32 %v61, %v107
  %v120 = vadd.f32 %v62, %v108
  %v121 = vadd.f32 %v63, %v109
  %v122 = vadd.f32 %v64, %v110
  %v123 = vadd.f32 %v65, %v111
  %v124 = vadd.f32 %v66, %v112
  %s125 = scalar_lea.vmem %s0, 2
  %v126 = vld [vmem:[%s125] ss:$4 sm:$0x7]
  %127 = vset.pattern.permute.xlu0 2
  %128 = vperm.xlu0 %127, %v14
  %v129 = vpop.permute.xlu0 %128
  %131 = vset.pattern.permute.xlu0 2
  %132 = vperm.xlu0 %131, %v15
  %v133 = vpop.permute.xlu0 %132
  %135 = vset.pattern.permute.xlu0 2
  %136 = vperm.xlu0 %135, %v16
  %v137 = vpop.permute.xlu0 %136
  %139 = vset.pattern.permute.xlu0 2
  %140 = vperm.xlu0 %139, %v17
  %v141 = vpop.permute.xlu0 %140
  %v144 = vlaneseq
  %v145 = vshrl.u32 %v144, 7
  %v146 = vsub.s32 0, %v145
  %v147 = vrot.slane %v126, %v146
  %v148 = vlaneseq
  %v149 = vshrl.u32 %v148, 7
  %v150 = vsub.s32 1, %v149
  %v151 = vrot.slane %v126, %v150
  %v152 = vlaneseq
  %v153 = vshrl.u32 %v152, 7
  %v154 = vsub.s32 2, %v153
  %v155 = vrot.slane %v126, %v154
  %v159 = vmul.f32 %v129, %v147
  %v160 = vmul.f32 %v129, %v151
  %v161 = vmul.f32 %v129, %v155
  %v162 = vmul.f32 %v133, %v147
  %v163 = vmul.f32 %v133, %v151
  %v164 = vmul.f32 %v133, %v155
  %v165 = vmul.f32 %v137, %v147
  %v166 = vmul.f32 %v137, %v151
  %v167 = vmul.f32 %v137, %v155
  %v168 = vmul.f32 %v141, %v147
  %v169 = vmul.f32 %v141, %v151
  %v170 = vmul.f32 %v141, %v155
  %v171 = vadd.f32 %v113, %v159
  %v172 = vadd.f32 %v114, %v160
  %v173 = vadd.f32 %v115, %v161
  %v174 = vadd.f32 %v116, %v162
  %v175 = vadd.f32 %v117, %v163
  %v176 = vadd.f32 %v118, %v164
  %v177 = vadd.f32 %v119, %v165
  %v178 = vadd.f32 %v120, %v166
  %v179 = vadd.f32 %v121, %v167
  %v180 = vadd.f32 %v122, %v168
  %v181 = vadd.f32 %v123, %v169
  %v182 = vadd.f32 %v124, %v170
  %s183 = scalar_lea.vmem %s0, 3
  %v184 = vld [vmem:[%s183] ss:$4 sm:$0x7]
  %185 = vset.pattern.permute.xlu0 3
  %186 = vperm.xlu0 %185, %v14
  %v187 = vpop.permute.xlu0 %186
  %189 = vset.pattern.permute.xlu0 3
  %190 = vperm.xlu0 %189, %v15
  %v191 = vpop.permute.xlu0 %190
  %193 = vset.pattern.permute.xlu0 3
  %194 = vperm.xlu0 %193, %v16
  %v195 = vpop.permute.xlu0 %194
  %197 = vset.pattern.permute.xlu0 3
  %198 = vperm.xlu0 %197, %v17
  %v199 = vpop.permute.xlu0 %198
  %v202 = vlaneseq
  %v203 = vshrl.u32 %v202, 7
  %v204 = vsub.s32 0, %v203
  %v205 = vrot.slane %v184, %v204
  %v206 = vlaneseq
  %v207 = vshrl.u32 %v206, 7
  %v208 = vsub.s32 1, %v207
  %v209 = vrot.slane %v184, %v208
  %v210 = vlaneseq
  %v211 = vshrl.u32 %v210, 7
  %v212 = vsub.s32 2, %v211
  %v213 = vrot.slane %v184, %v212
  %v217 = vmul.f32 %v187, %v205
  %v218 = vmul.f32 %v187, %v209
  %v219 = vmul.f32 %v187, %v213
  %v220 = vmul.f32 %v191, %v205
  %v221 = vmul.f32 %v191, %v209
  %v222 = vmul.f32 %v191, %v213
  %v223 = vmul.f32 %v195, %v205
  %v224 = vmul.f32 %v195, %v209
  %v225 = vmul.f32 %v195, %v213
  %v226 = vmul.f32 %v199, %v205
  %v227 = vmul.f32 %v199, %v209
  %v228 = vmul.f32 %v199, %v213
  %v229 = vadd.f32 %v171, %v217
  %v230 = vadd.f32 %v172, %v218
  %v231 = vadd.f32 %v173, %v219
  %v232 = vadd.f32 %v174, %v220
  %v233 = vadd.f32 %v175, %v221
  %v234 = vadd.f32 %v176, %v222
  %v235 = vadd.f32 %v177, %v223
  %v236 = vadd.f32 %v178, %v224
  %v237 = vadd.f32 %v179, %v225
  %v238 = vadd.f32 %v180, %v226
  %v239 = vadd.f32 %v181, %v227
  %v240 = vadd.f32 %v182, %v228
  %241 = vst [vmem:[#allocation2] sm:$0xff] %v229
  %242 = vst [vmem:[#allocation2 + $0x8] sm:$0xff] %v230
  %vm243 = vcmask 367616
  %244 = vst.msk [vmem:[#allocation2 + $0x10] sm:$0xff] %vm243, %v231
  %245 = vst [vmem:[#allocation2 + $0x18] sm:$0xff] %v232
  %246 = vst [vmem:[#allocation2 + $0x20] sm:$0xff] %v233
  %247 = vst.msk [vmem:[#allocation2 + $0x28] sm:$0xff] %vm243, %v234
  %248 = vst [vmem:[#allocation2 + $0x30] sm:$0xff] %v235
  %249 = vst [vmem:[#allocation2 + $0x38] sm:$0xff] %v236
  %250 = vst.msk [vmem:[#allocation2 + $0x40] sm:$0xff] %vm243, %v237
  %251 = vst [vmem:[#allocation2 + $0x48] sm:$0x7] %v238
  %252 = vst [vmem:[#allocation2 + $0x50] sm:$0x7] %v239
  %vm253 = vcmask 362496
  %254 = vst.msk [vmem:[#allocation2 + $0x58] sm:$0x7] %vm253, %v240
  %v255 = vld [vmem:[%s2] sm:$0x7]
  %v256 = vld [vmem:[#allocation2] sm:$0x7]
  %v257 = vld [vmem:[#allocation2 + $0x8] sm:$0x7]
  %v258 = vld [vmem:[#allocation2 + $0x10] sm:$0x7]
  %v259 = vadd.f32 %v256, 0.0
  %v260 = vadd.f32 %v257, 0.0
  %v261 = vadd.f32 %v258, 0.0
  %v262 = vld [vmem:[#allocation2] sm:$0xc0]
  %v263 = vld [vmem:[#allocation2 + $0x8] sm:$0xc0]
  %v264 = vld [vmem:[#allocation2 + $0x10] sm:$0xc0]
  %v265 = vld [vmem:[#allocation2 + $0x18] sm:$0x1]
  %v266 = vld [vmem:[#allocation2 + $0x20] sm:$0x1]
  %v267 = vld [vmem:[#allocation2 + $0x28] sm:$0x1]
  %vm274 = vcmask 1041408
  %v275 = vrot.slane %v262, 6
  %v276 = vrot.slane %v265, 6
  %v277 = vsel %vm274, %v275, %v276
  %v278 = vrot.slane %v263, 6
  %v279 = vrot.slane %v266, 6
  %v280 = vsel %vm274, %v278, %v279
  %v281 = vrot.slane %v264, 6
  %v282 = vrot.slane %v267, 6
  %v283 = vsel %vm274, %v281, %v282
  %284 = vrot.lane.b32.xlu0 %v277, 1
  %v285 = vpop.permute.xlu0 %284
  %286 = vrot.lane.b32.xlu0 %v280, 1
  %v287 = vpop.permute.xlu0 %286
  %288 = vrot.lane.b32.xlu0 %v283, 1
  %v289 = vpop.permute.xlu0 %288
  %vm290 = vcmask 7168
  %v291 = vsel %vm290, %v285, %v287
  %v292 = vsel %vm290, %v287, %v289
  %v296 = vadd.f32 %v259, %v285
  %v297 = vadd.f32 %v260, %v291
  %v298 = vadd.f32 %v261, %v292
  %v299 = vld [vmem:[#allocation2 + $0x30] sm:$0x1c]
  %v300 = vld [vmem:[#allocation2 + $0x38] sm:$0x1c]
  %v301 = vld [vmem:[#allocation2 + $0x40] sm:$0x1c]
  %v305 = vrot.slane %v299, 2
  %v306 = vrot.slane %v300, 2
  %v307 = vrot.slane %v301, 2
  %308 = vrot.lane.b32.xlu0 %v305, 12
  %v309 = vpop.permute.xlu0 %308
  %310 = vrot.lane.b32.xlu0 %v306, 12
  %v311 = vpop.permute.xlu0 %310
  %312 = vrot.lane.b32.xlu0 %v307, 12
  %v313 = vpop.permute.xlu0 %312
  %vm314 = vcmask 97280
  %v315 = vsel %vm314, %v309, %v311
  %v316 = vsel %vm314, %v311, %v313
  %v320 = vadd.f32 %v296, %v309
  %v321 = vadd.f32 %v297, %v315
  %v322 = vadd.f32 %v298, %v316
  %v323 = vld [vmem:[#allocation2 + $0x48] sm:$0x7]
  %v324 = vld [vmem:[#allocation2 + $0x50] sm:$0x7]
  %v325 = vld [vmem:[#allocation2 + $0x58] sm:$0x7]
  %329 = vrot.lane.b32.xlu0 %v323, 13
  %v330 = vpop.permute.xlu0 %329
  %331 = vrot.lane.b32.xlu0 %v324, 13
  %v332 = vpop.permute.xlu0 %331
  %333 = vrot.lane.b32.xlu0 %v325, 13
  %v334 = vpop.permute.xlu0 %333
  %vm335 = vcmask 105472
  %v336 = vsel %vm335, %v330, %v332
  %v337 = vsel %vm335, %v332, %v334
  %v341 = vadd.f32 %v320, %v330
  %v342 = vadd.f32 %v321, %v336
  %v343 = vadd.f32 %v322, %v337
  %345 = vset.pattern.permute.xlu0 0
  %346 = vperm.xlu0 %345, %v255
  %v347 = vpop.permute.xlu0 %346
  %v349 = vadd.f32 %v341, %v347
  %v350 = vadd.f32 %v342, %v347
  %v351 = vadd.f32 %v343, %v347
  %v355 = vcombine.low %v349, %v350
  %356 = vrot.lane.b32.xlu0 %v355, 115
  %v357 = vpop.permute.xlu0 %356
  %358 = vrot.lane.b32.xlu0 %v351, 115
  %v359 = vpop.permute.xlu0 %358
  %v360 = vrot.slane %v357, 4
  %v361 = vrot.slane %v359, 4
  %vm362 = vcmask 1043456
  %v363 = vsel %vm362, %v360, %v361
  %vm364 = vcmask 941056
  %v365 = vsel %vm364, %v357, %v363
  %368 = vst [vmem:[%s3] sm:$0x77] %v365
  %vm369 = vcmask 256000
  %370 = vst.msk [vmem:[%s3 + $0x8] sm:$0x7] %vm369, %v359
  %v371 = vld [vmem:[#allocation2] sm:$0x38]
  %v372 = vld [vmem:[#allocation2 + $0x8] sm:$0x38]
  %v373 = vld [vmem:[#allocation2 + $0x10] sm:$0x38]
  %v374 = vadd.f32 %v371, 0.0
  %v375 = vadd.f32 %v372, 0.0
  %v376 = vadd.f32 %v373, 0.0
  %v377 = vld [vmem:[#allocation2 + $0x30] sm:$0xe0]
  %v378 = vld [vmem:[#allocation2 + $0x38] sm:$0xe0]
  %v379 = vld [vmem:[#allocation2 + $0x40] sm:$0xe0]
  %v383 = vrot.slane %v377, 2
  %v384 = vrot.slane %v378, 2
  %v385 = vrot.slane %v379, 2
  %386 = vrot.lane.b32.xlu0 %v383, 12
  %v387 = vpop.permute.xlu0 %386
  %388 = vrot.lane.b32.xlu0 %v384, 12
  %v389 = vpop.permute.xlu0 %388
  %390 = vrot.lane.b32.xlu0 %v385, 12
  %v391 = vpop.permute.xlu0 %390
  %v392 = vsel %vm314, %v387, %v389
  %v393 = vsel %vm314, %v389, %v391
  %v397 = vadd.f32 %v374, %v387
  %v398 = vadd.f32 %v375, %v392
  %v399 = vadd.f32 %v376, %v393
  %v400 = vrot.slane %v347, 5
  %v402 = vadd.f32 %v397, %v400
  %v403 = vadd.f32 %v398, %v400
  %v404 = vadd.f32 %v399, %v400
  %v408 = vcombine.low %v402, %v403
  %v409 = vcombine.high %v402, %v403
  %v410 = vcombine.high %v404, %v404
  %vm411 = vcmask 1040384
  %vm412 = vcmask 1044484
  %vm413 = vmor %vm411, %vm412
  %v414 = vrot.slane %v408, 7
  %v415 = vrot.slane %v414, 4
  %v416 = vrot.slane %v409, 7
  %v417 = vsel %vm413, %v415, %v416
  %v418 = vrot.slane %v404, 7
  %v419 = vrot.slane %v418, 4
  %v420 = vrot.slane %v410, 7
  %v421 = vsel %vm413, %v419, %v420
  %422 = vrot.lane.b32.xlu0 %v417, 115
  %v423 = vpop.permute.xlu0 %422
  %424 = vrot.lane.b32.xlu0 %v421, 115
  %v425 = vpop.permute.xlu0 %424
  %v426 = vrot.slane %v423, 4
  %v427 = vrot.slane %v425, 4
  %v428 = vsel %vm362, %v426, %v427
  %v429 = vsel %vm364, %v423, %v428
  %s432 = scalar_lea.vmem %s3, 12
  %433 = vst [vmem:[%s432] sm:$0x77] %v429
  %434 = vst.msk [vmem:[%s432 + $0x8] sm:$0x7] %vm369, %v425
  %v435 = vld [vmem:[#allocation2 + $0x18] sm:$0xe]
  %v436 = vld [vmem:[#allocation2 + $0x20] sm:$0xe]
  %v437 = vld [vmem:[#allocation2 + $0x28] sm:$0xe]
  %v438 = vadd.f32 %v435, 0.0
  %v439 = vadd.f32 %v436, 0.0
  %v440 = vadd.f32 %v437, 0.0
  %v441 = vld [vmem:[#allocation2 + $0x18] sm:$0x80]
  %v442 = vld [vmem:[#allocation2 + $0x20] sm:$0x80]
  %v443 = vld [vmem:[#allocation2 + $0x28] sm:$0x80]
  %v444 = vld [vmem:[#allocation2 + $0x30] sm:$0x3]
  %v445 = vld [vmem:[#allocation2 + $0x38] sm:$0x3]
  %v446 = vld [vmem:[#allocation2 + $0x40] sm:$0x3]
  %v453 = vrot.slane %v441, 6
  %v454 = vrot.slane %v444, 6
  %v455 = vsel %vm274, %v453, %v454
  %v456 = vrot.slane %v442, 6
  %v457 = vrot.slane %v445, 6
  %v458 = vsel %vm274, %v456, %v457
  %v459 = vrot.slane %v443, 6
  %v460 = vrot.slane %v446, 6
  %v461 = vsel %vm274, %v459, %v460
  %462 = vrot.lane.b32.xlu0 %v455, 1
  %v463 = vpop.permute.xlu0 %462
  %464 = vrot.lane.b32.xlu0 %v458, 1
  %v465 = vpop.permute.xlu0 %464
  %466 = vrot.lane.b32.xlu0 %v461, 1
  %v467 = vpop.permute.xlu0 %466
  %v468 = vsel %vm290, %v463, %v465
  %v469 = vsel %vm290, %v465, %v467
  %v473 = vadd.f32 %v438, %v463
  %v474 = vadd.f32 %v439, %v468
  %v475 = vadd.f32 %v440, %v469
  %v476 = vrot.slane %v347, 7
  %v478 = vadd.f32 %v473, %v476
  %v479 = vadd.f32 %v474, %v476
  %v480 = vadd.f32 %v475, %v476
  %v484 = vcombine.low %v478, %v479
  %v485 = vrot.slane %v484, 5
  %v486 = vrot.slane %v485, 4
  %v487 = vrot.slane %v480, 5
  %v488 = vrot.slane %v487, 4
  %489 = vrot.lane.b32.xlu0 %v486, 115
  %v490 = vpop.permute.xlu0 %489
  %491 = vrot.lane.b32.xlu0 %v488, 115
  %v492 = vpop.permute.xlu0 %491
  %v493 = vrot.slane %v490, 4
  %v494 = vrot.slane %v492, 4
  %v495 = vsel %vm362, %v493, %v494
  %v496 = vsel %vm364, %v490, %v495
  %s499 = scalar_lea.vmem %s3, 24
  %500 = vst [vmem:[%s499] sm:$0x77] %v496
  %501 = vst.msk [vmem:[%s499 + $0x8] sm:$0x7] %vm369, %v492
  %v502 = vld [vmem:[#allocation2 + $0x18] sm:$0x70]
  %v503 = vld [vmem:[#allocation2 + $0x20] sm:$0x70]
  %v504 = vld [vmem:[#allocation2 + $0x28] sm:$0x70]
  %v505 = vadd.f32 %v502, 0.0
  %v506 = vadd.f32 %v503, 0.0
  %v507 = vadd.f32 %v504, 0.0
  %v508 = vrot.slane %v347, 4
  %v510 = vadd.f32 %v505, %v508
  %v511 = vadd.f32 %v506, %v508
  %v512 = vadd.f32 %v507, %v508
  %v516 = vcombine.high %v510, %v511
  %v517 = vcombine.high %v512, %v512
  %518 = vrot.lane.b32.xlu0 %v516, 115
  %v519 = vpop.permute.xlu0 %518
  %520 = vrot.lane.b32.xlu0 %v517, 115
  %v521 = vpop.permute.xlu0 %520
  %v522 = vrot.slane %v519, 4
  %v523 = vrot.slane %v521, 4
  %v524 = vsel %vm362, %v522, %v523
  %v525 = vsel %vm364, %v519, %v524
  %s528 = scalar_lea.vmem %s3, 36
  %529 = vst [vmem:[%s528] sm:$0x77] %v525
  %530 = vst.msk [vmem:[%s528 + $0x8] sm:$0x7] %vm369, %v521
  // Predicated region
  $region14: #{periodic_conv_transpose_2d.1} parent=0 // pred_check
    _
  $region15: #{periodic_conv_transpose_2d.1} parent=0 // pred_check_branch
    %532 = sbr.rel (0) target = $region17
  $region16: #{periodic_conv_transpose_2d.1} parent=0 // pred_region
    _
  $region17: #{periodic_conv_transpose_2d.1} parent=0 // pred_fallthru
    _
  // Predicated region
  $region18: #{periodic_conv_transpose_2d.1} parent=0 // pred_check
    _
  $region19: #{periodic_conv_transpose_2d.1} parent=0 // pred_check_branch
    %534 = sbr.rel (0) target = $region21
  $region20: #{periodic_conv_transpose_2d.1} parent=0 // pred_region
    _
  $region21: #{periodic_conv_transpose_2d.1} parent=0 // pred_fallthru
    _

</llo_original>
